<compile_context>
chip_gen: v7x
topology: tpu7x:2x2x1
jax: 0.10.0
libtpu: 0.0.40
codegen_flags: <defaults>
</compile_context>

<pallas_src>
import functools

import jax
import jax.numpy as jnp
from jax import lax
from jax.experimental import pallas as pl
from jax.experimental.pallas import tpu as pltpu

EPS = 1e-6


def _round_up(a, b):
    return (a + b - 1) // b * b


def gem_kernel(p_ref, x_ref, o_ref, acc_ref, *, true_l, lane_tile):
    # p_ref:  SMEM (1,) f32 learnable exponent
    # x_ref:  VMEM (row_tile, lane_tile) tile of the flattened (R, L) input
    # o_ref:  VMEM (row_tile, 1) per-row GeM result (written on last L tile)
    # acc_ref: VMEM (row_tile, 128) f32 lane-wise partial-sum accumulator
    k = pl.program_id(1)

    @pl.when(k == 0)
    def _init():
        acc_ref[...] = jnp.zeros_like(acc_ref)

    p = p_ref[0]
    x = x_ref[...].astype(jnp.float32)

    # clamp(min=eps), then x ** p with a traced exponent: exp(p * log(x));
    # xc > 0 so log is safe (padding values also clamp to eps -> finite).
    xc = jnp.maximum(x, EPS)
    xp = jnp.exp(p * jnp.log(xc))
    # TODO(synk): on v6e/v7x the EUP (log+exp) is the binding unit; bf16
    # transcendentals would ~2x it but need precision validation vs eps=1e-6.

    # Mask out padded L columns so they contribute 0 to the sum.
    col = k * lane_tile + lax.broadcasted_iota(jnp.int32, xp.shape, 1)
    xp = jnp.where(col < true_l, xp, 0.0)

    # Lane-wise fold (VPU adds only): (row_tile, lane_tile) -> (row_tile, 128).
    part = xp[:, 0:128]
    for j in range(1, lane_tile // 128):
        part = part + xp[:, j * 128:(j + 1) * 128]
    acc_ref[...] += part

    @pl.when(k == pl.num_programs(1) - 1)
    def _finalize():
        # Single cross-lane (XLU) reduce per row tile, divide by the true L,
        # then the 1/p root with the reciprocal hoisted to a scalar.
        total = jnp.sum(acc_ref[...], axis=-1, keepdims=True)
        mean = total * (1.0 / true_l)
        inv_p = 1.0 / p
        o_ref[...] = jnp.exp(jnp.log(mean) * inv_p).astype(o_ref.dtype)


def gem_pallas(x, p, *, row_tile=512, max_lane_tile=2048):
    """GeM pooling. x: (N, C, L); p: (1,) learnable exponent. Returns (N, C, 1)."""
    N, C, L = x.shape
    R = N * C
    xf = x.reshape(R, L)

    # Tile sizes: f32 input block <= 512*2048*4B = 4 MiB; with double buffering
    # and the (row_tile, 128) accumulator this fits the 32 MiB scoped-VMEM
    # default on every generation (and v7x's 64 MiB physical VMEM).
    tl = min(max_lane_tile, _round_up(L, 128))
    lp = _round_up(L, tl)
    tr = min(row_tile, _round_up(R, 8))
    rp = _round_up(R, tr)

    if (rp, lp) != (R, L):
        xf = jnp.pad(xf, ((0, rp - R), (0, lp - L)))

    kernel = functools.partial(gem_kernel, true_l=L, lane_tile=tl)

    out = pl.pallas_call(
        kernel,
        out_shape=jax.ShapeDtypeStruct((rp, 1), x.dtype),
        grid=(rp // tr, lp // tl),
        in_specs=[
            pl.BlockSpec(memory_space=pltpu.SMEM),             # p (scalar param)
            pl.BlockSpec((tr, tl), lambda i, k: (i, k)),        # x row/L tiles
        ],
        out_specs=pl.BlockSpec((tr, 1), lambda i, k: (i, 0)),   # per-row result
        scratch_shapes=[pltpu.VMEM((tr, 128), jnp.float32)],    # partial sums
        compiler_params=pltpu.CompilerParams(
            dimension_semantics=("parallel", "arbitrary"),      # rows // on v7x TCs
            vmem_limit_bytes=32 * 1024 * 1024,
        ),
    )(p.astype(jnp.float32), xf)

    return out[:R].reshape(N, C, 1)


def gem_ref(x, p, eps=EPS):
    """Plain-JAX reference mirroring the PyTorch gem()."""
    xc = jnp.maximum(x.astype(jnp.float32), eps)
    m = jnp.mean(xc ** p[0], axis=-1, keepdims=True)
    return (m ** (1.0 / p[0])).astype(x.dtype)


if __name__ == "__main__":
    key = jax.random.PRNGKey(0)
    N, C, L = 2, 4, 16
    x = jax.random.normal(key, (N, C, L), dtype=jnp.float32)

    # Parameter init per GeM.__init__: p = ones(1) * 3
    p = jnp.ones((1,), dtype=jnp.float32) * 3.0

    out = gem_pallas(x, p)
    jax.block_until_ready(out)

    ref = gem_ref(x, p)
    assert out.shape == (N, C, 1)
    assert jnp.allclose(out, ref, rtol=1e-4, atol=1e-5)

    print("KERNEL_OK")
</pallas_src>

<mosaic_0001>
module attributes {stable_mosaic.version = 11 : i64} {
  func.func @gem_kernel(%arg0: i32, %arg1: i32, %arg2: memref<1xf32, #tpu.memory_space<smem>>, %arg3: memref<8x128xf32, #tpu.memory_space<vmem>>, %arg4: memref<8x1xf32, #tpu.memory_space<vmem>>, %arg5: memref<8x128xf32, #tpu.memory_space<vmem>>) attributes {dimension_semantics = [#tpu.dimension_semantics<parallel>, #tpu.dimension_semantics<arbitrary>], iteration_bounds = array<i64: 1, 1>, scalar_prefetch = 0 : i64, scratch_operands = 1 : i64, tpu.core_type = #tpu.core_type<tc>, window_params = [{transform_indices = @transform_0, window_bounds = array<i64: 1>}, {transform_indices = @transform_1, window_bounds = array<i64: 8, 128>}, {transform_indices = @transform_2, window_bounds = array<i64: 8, 1>}]} {
    %c0_i32 = arith.constant 0 : i32
    %0 = arith.cmpi eq, %arg1, %c0_i32 : i32
    %1 = arith.extui %0 : i1 to i32
    %c0_i32_0 = arith.constant 0 : i32
    %2 = arith.cmpi ne, %1, %c0_i32_0 : i32
    scf.if %2 {
      %cst_10 = arith.constant 0.000000e+00 : f32
      %25 = vector.broadcast %cst_10 : f32 to vector<8x128xf32>
      %c0_11 = arith.constant 0 : index
      %c0_12 = arith.constant 0 : index
      %26 = vector.load %arg5[%c0_11, %c0_12] : memref<8x128xf32, #tpu.memory_space<vmem>>, vector<8x128xf32>
      tpu.vector_store %arg5[%c0_11, %c0_12], %25 {strides = array<i32>} : memref<8x128xf32, #tpu.memory_space<vmem>>, vector<8x128xf32>,
    } else {
    }
    %c0 = arith.constant 0 : index
    %3 = memref.load %arg2[%c0] : memref<1xf32, #tpu.memory_space<smem>>
    %c0_1 = arith.constant 0 : index
    %c0_2 = arith.constant 0 : index
    %4 = vector.load %arg3[%c0_1, %c0_2] : memref<8x128xf32, #tpu.memory_space<vmem>>, vector<8x128xf32>
    %cst = arith.constant 9.99999997E-7 : f32
    %5 = vector.broadcast %cst : f32 to vector<8x128xf32>
    %6 = arith.maximumf %4, %5 : vector<8x128xf32>
    %7 = math.log %6 : vector<8x128xf32>
    %8 = vector.broadcast %3 : f32 to vector<8x128xf32>
    %9 = arith.mulf %8, %7 : vector<8x128xf32>
    %10 = math.exp %9 : vector<8x128xf32>
    %c128_i32 = arith.constant 128 : i32
    %11 = arith.muli %arg1, %c128_i32 : i32
    %12 = tpu.iota {dimensions = array<i32: 1>} : vector<8x128xi32>
    %13 = vector.broadcast %11 : i32 to vector<8x128xi32>
    %14 = arith.addi %13, %12 : vector<8x128xi32>
    %c16_i32 = arith.constant 16 : i32
    %15 = vector.broadcast %c16_i32 : i32 to vector<8x128xi32>
    %16 = arith.cmpi slt, %14, %15 : vector<8x128xi32>
    %cst_3 = arith.constant 0.000000e+00 : f32
    %17 = vector.broadcast %cst_3 : f32 to vector<8x128xf32>
    %18 = arith.select %16, %10, %17 : vector<8x128xi1>, vector<8x128xf32>
    %c0_4 = arith.constant 0 : index
    %c0_5 = arith.constant 0 : index
    %19 = vector.load %arg5[%c0_4, %c0_5] : memref<8x128xf32, #tpu.memory_space<vmem>>, vector<8x128xf32>
    %20 = arith.addf %19, %18 : vector<8x128xf32>
    %c0_6 = arith.constant 0 : index
    %c0_7 = arith.constant 0 : index
    %21 = vector.load %arg5[%c0_6, %c0_7] : memref<8x128xf32, #tpu.memory_space<vmem>>, vector<8x128xf32>
    tpu.vector_store %arg5[%c0_6, %c0_7], %20 {strides = array<i32>} : memref<8x128xf32, #tpu.memory_space<vmem>>, vector<8x128xf32>,
    %c0_i32_8 = arith.constant 0 : i32
    %22 = arith.cmpi eq, %arg1, %c0_i32_8 : i32
    %23 = arith.extui %22 : i1 to i32
    %c0_i32_9 = arith.constant 0 : i32
    %24 = arith.cmpi ne, %23, %c0_i32_9 : i32
    scf.if %24 {
      %c0_10 = arith.constant 0 : index
      %c0_11 = arith.constant 0 : index
      %25 = vector.load %arg5[%c0_10, %c0_11] : memref<8x128xf32, #tpu.memory_space<vmem>>, vector<8x128xf32>
      %cst_12 = arith.constant dense<0.000000e+00> : vector<8xf32>
      %26 = vector.multi_reduction <add>, %25, %cst_12 [1] : vector<8x128xf32> to vector<8xf32>
      %27 = vector.shape_cast %26 : vector<8xf32> to vector<8x1xf32>
      %cst_13 = arith.constant 6.250000e-02 : f32
      %28 = vector.broadcast %cst_13 : f32 to vector<8x1xf32>
      %29 = arith.mulf %27, %28 : vector<8x1xf32>
      %cst_14 = arith.constant 1.000000e+00 : f32
      %30 = arith.divf %cst_14, %3 : f32
      %31 = math.log %29 : vector<8x1xf32>
      %32 = vector.broadcast %30 : f32 to vector<8x1xf32>
      %33 = arith.mulf %31, %32 : vector<8x1xf32>
      %34 = math.exp %33 : vector<8x1xf32>
      %c0_15 = arith.constant 0 : index
      %c0_16 = arith.constant 0 : index
      %35 = vector.load %arg4[%c0_15, %c0_16] : memref<8x1xf32, #tpu.memory_space<vmem>>, vector<8x1xf32>
      tpu.vector_store %arg4[%c0_15, %c0_16], %34 {strides = array<i32>} : memref<8x1xf32, #tpu.memory_space<vmem>>, vector<8x1xf32>,
    } else {
    }
    return
  }
  func.func @transform_0(%arg0: i32, %arg1: i32) -> i32 {
    %c0_i32 = arith.constant 0 : i32
    %c0_i32_0 = arith.constant 0 : i32
    return %c0_i32 : i32
  }
  func.func @transform_1(%arg0: i32, %arg1: i32) -> (i32, i32) {
    %c0_i32 = arith.constant 0 : i32
    return %arg0, %arg1 : i32, i32
  }
  func.func @transform_2(%arg0: i32, %arg1: i32) -> (i32, i32) {
    %c0_i32 = arith.constant 0 : i32
    %c0_i32_0 = arith.constant 0 : i32
    return %arg0, %c0_i32 : i32, i32
  }
}

</mosaic_0001>

<llo_original>
// kernel: tpu_custom_call.1
$region0: #{tpu_custom_call.1}
  #allocation0 [shape = 'u32[]', space=smem, size = 0x4, offset = 0x4, fixed_abs, tag = 'smem constant byte address 0x4 - core index']
  #allocation1 [shape = 'u32[144,128]{1,0:T(1,128)}', space=vmem, size = 0x12000, scoped, tag = 'internal scratch']
  #allocation2 [shape = 'f32[8,128]{1,0:T(8,128)}', space=vmem, size = 0x1000, scoped, tag = 'scratch operand']
  #allocation3 [shape = 'f32[1]{0:T(128)S(6)}', space=smem, size = 0x200, scoped, tag = 'scoped memory for tpu_custom_call.1']
  %s0 = inlined_call_operand.<no memory space> [shape: f32[1], index: 0, kind: input, shape index: {}]
  %s1 = inlined_call_operand.hbm [shape: f32[8,128], index: 1, kind: input, shape index: {}]
  %s2 = inlined_call_operand.vmem [shape: f32[8,1], index: 2, kind: output, shape index: {}]
  %s3 = sld [smem:[#allocation0]]
  $region30: #{tpu_custom_call.1} parent=0
    _
  %s5 = ssub.s32 1, %s3
  %s6 = scalar_select 0, %s5, %s3
  %7 = sst [smem:[#allocation3]] %s0
  $region1: #{tpu_custom_call.1} parent=0
    #allocation4 [shape = 'u8[4096]{0}', space=vmem, size = 0x1000, scoped, tag = 'input window, operand 1, single buffered']
    #allocation5 [shape = 's32[1]{0}', space=sflag, size = 0x4, scoped, tag = 'scoped memory for tpu_custom_call.1']
    %8 = vsyncpa [#allocation5], 0
    // Predicated region
    $region2: #{tpu_custom_call.1} parent=1 // pred_check
      _
    $region3: #{tpu_custom_call.1} parent=1 // pred_check_branch
      %10 = sbr.rel (0) target = $region5
    $region4: #{tpu_custom_call.1} parent=1 // pred_region
      _
    $region5: #{tpu_custom_call.1} parent=1 // pred_fallthru
      _
    // Predicated region
    $region6: #{tpu_custom_call.1} parent=1 // pred_check
      _
    $region7: #{tpu_custom_call.1} parent=1 // pred_check_branch
      %12 = sbr.rel (0) target = $region9
    $region8: #{tpu_custom_call.1} parent=1 // pred_region
      %s14 = ssub.s32 128, 128
      %15 = vsyncadd [#allocation5], %s14
      %s17 = sshll.u32 [#allocation4], 4
      %s18 = int_to_ptr.vmem [resolvable:$true] %s17
      %20 = dma.hbm_to_vmem [thread:$0]  %s1, 128, %s18, [#allocation5]
    $region9: #{tpu_custom_call.1} parent=1 // pred_fallthru
      _
    // Predicated region
    $region10: #{tpu_custom_call.1} parent=1 // pred_check
      _
    $region11: #{tpu_custom_call.1} parent=1 // pred_check_branch
      %22 = sbr.rel (0) target = $region13
    $region12: #{tpu_custom_call.1} parent=1 // pred_region
      %23 = dma.done [#allocation5], 128
    $region13: #{tpu_custom_call.1} parent=1 // pred_fallthru
      _
    %p24 = scmp.eq.s32.totalorder 0, 0
    // Predicated region
    $region14: #{tpu_custom_call.1} parent=1 // pred_check
      %p25 = pneg %p24
    $region15: #{tpu_custom_call.1} parent=1 // pred_check_branch
      %27 = sbr.rel (%p25) target = $region17
    $region16: #{tpu_custom_call.1} parent=1 // pred_region
      %28 = vst [vmem:[#allocation2] sm:$0xff] 0.0
    $region17: #{tpu_custom_call.1} parent=1 // pred_fallthru
      _
    %s29 = sld [smem:[#allocation3]]
    %v30 = vld [vmem:[#allocation4] sm:$0xff]
    %v31 = vmax.f32 %v30, 1e-06
    %v32 = vlog2.pop %v31
    %v33 = vmul.f32 %v32, 0.6931472
    %v34 = vstv %s29
    %v35 = vmul.f32 %v34, %v33
    %v36 = vmul.f32 %v35, 1.442695
    %v37 = vpow.pop %v36
    %s38 = smul.u32 0, 128
    %v39 = vlaneseq
    %v40 = vand.u32 %v39, 127
    %v41 = vstv %s38
    %v42 = vadd.s32 %v41, %v40
    %vm43 = vcmp.lt.s32.totalorder %v42, 16
    %v44 = vsel %vm43, %v37, 0.0
    %v45 = vld [vmem:[#allocation2] sm:$0xff]
    %v46 = vadd.f32 %v45, %v44
    %47 = vst [vmem:[#allocation2] sm:$0xff] %v46
    // Predicated region
    $region18: #{tpu_custom_call.1} parent=1 // pred_check
      %p48 = pneg %p24
    $region19: #{tpu_custom_call.1} parent=1 // pred_check_branch
      %50 = sbr.rel (%p48) target = $region21
    $region20: #{tpu_custom_call.1} parent=1 // pred_region
      %v51 = vld [vmem:[#allocation2] sm:$0xff]
      %52 = vadd.xlane.f32.xlu0 %v51
      %v53 = vpop.xlane.xlu0 %52
      %v54 = vmul.f32 %v53, 0.0625
      %v55 = vstv %s29
      %v56 = vrcp.pop %v55
      %s57 = vtos %v56
      %v58 = vlog2.pop %v54
      %v59 = vmul.f32 %v58, 0.6931472
      %v60 = vstv %s57
      %v61 = vmul.f32 %v59, %v60
      %v62 = vmul.f32 %v61, 1.442695
      %v63 = vpow.pop %v62
      %vm64 = vcmask 7168
      %65 = vst.msk [vmem:[%s2] sm:$0xff] %vm64, %v63
    $region21: #{tpu_custom_call.1} parent=1 // pred_fallthru
      _
    // Predicated region
    $region22: #{tpu_custom_call.1} parent=1 // pred_check
      _
    $region23: #{tpu_custom_call.1} parent=1 // pred_check_branch
      %67 = sbr.rel (0) target = $region25
    $region24: #{tpu_custom_call.1} parent=1 // pred_region
      _
    $region25: #{tpu_custom_call.1} parent=1 // pred_fallthru
      _
    // Predicated region
    $region26: #{tpu_custom_call.1} parent=1 // pred_check
      _
    $region27: #{tpu_custom_call.1} parent=1 // pred_check_branch
      %69 = sbr.rel (0) target = $region29
    $region28: #{tpu_custom_call.1} parent=1 // pred_region
      _
    $region29: #{tpu_custom_call.1} parent=1 // pred_fallthru
      _
    %70 = vsyncpa [#allocation5], 1

</llo_original>
